<compile_context>
chip_gen: v5e
topology: v5e:2x2
jax: 0.10.0
libtpu: 0.0.40
codegen_flags: <defaults>
</compile_context>

<pallas_src>
import functools

import numpy as np
import jax
import jax.numpy as jnp
from jax.experimental import pallas as pl
from jax.experimental.pallas import tpu as pltpu


def _basic_block_kernel(xs_ref, w1_ref, w2_ref, s1_ref, b1_ref, s2_ref, b2_ref,
                        out_ref, *, hp, gb, h_img, compute_dtype):
    """One grid step = `gb` H-padded groups of lane-packed images.

    xs_ref : (1, gb*(H+2), L) H-padded, lane-dense input in compute_dtype
             (L = nb*W*C; the W padding is folded into the conv bands).
    w*_ref : (3, L, L)  banded conv weights, one band per ky tap (compute_dtype).
    s*/b*  : (1, L)     folded inference BatchNorm scale / bias (f32).
    out_ref: (1, gb*(H+2)-2, L) f32; rows sitting at internal H-pad positions
             are junk and are dropped by the wrapper.
    """
    f32 = jnp.float32
    rp = xs_ref.shape[1]          # gb * (H + 2)
    m = rp - 2                    # rows produced per step

    x0 = xs_ref[0, 0:m, :]
    x1 = xs_ref[0, 1:m + 1, :]    # un-padded rows; doubles as the residual
    x2 = xs_ref[0, 2:rp, :]

    # ---- conv1: 3 full-row, lane-aligned banded matmuls (kx folded in band) ----
    acc1 = jnp.dot(x0, w1_ref[0], preferred_element_type=f32)
    acc1 = acc1 + jnp.dot(x1, w1_ref[1], preferred_element_type=f32)
    acc1 = acc1 + jnp.dot(x2, w1_ref[2], preferred_element_type=f32)

    # ---- bn1 (inference, folded) + relu in f32 ----
    h = jnp.maximum(acc1 * s1_ref[0] + b1_ref[0], 0.0)

    if gb > 1:
        # Zero the rows at internal H-pad positions so they act as conv2's zero
        # padding between the row-stacked groups.
        pos = jax.lax.broadcasted_iota(jnp.int32, (m, 1), 0) + 1
        rem = jax.lax.rem(pos, hp)
        keep = jnp.logical_and(rem != 0, rem != h_img + 1)
        h = jnp.where(keep, h, 0.0)

    # Single cast per conv; keep the intermediate as a value (no VMEM scratch
    # round trip) and build the two shifted conv2 operands via a zero-row concat.
    hc = h.astype(compute_dtype)
    zrow = jnp.zeros((1, hc.shape[1]), compute_dtype)
    up = jnp.concatenate([zrow, hc[:-1, :]], axis=0)   # H-pad row above
    dn = jnp.concatenate([hc[1:, :], zrow], axis=0)    # H-pad row below

    # ---- conv2: 3 banded matmuls over the implicitly H-padded intermediate ----
    acc2 = jnp.dot(up, w2_ref[0], preferred_element_type=f32)
    acc2 = acc2 + jnp.dot(hc, w2_ref[1], preferred_element_type=f32)
    acc2 = acc2 + jnp.dot(dn, w2_ref[2], preferred_element_type=f32)

    # ---- bn2 + residual (from the same input slab) + relu, f32 elementwise ----
    o = acc2 * s2_ref[0] + b2_ref[0] + x1.astype(f32)
    out_ref[0] = jnp.maximum(o, 0.0).astype(out_ref.dtype)


def _banded_conv_weight(w_oihw, *, w, nb):
    """(Cout, Cin, 3, 3) -> (3, nb*w*Cin, nb*w*Cout) banded ky-tap weights.

    band[ky, (n*w+iw)*Cin+ci, (n*w+ow)*Cout+co] = w[co, ci, ky, kx]
    where iw == ow + kx - 1 (zero elsewhere; out-of-range iw == implicit W pad).
    Block-diagonal over the nb lane-packed images.
    """
    cout, cin = int(w_oihw.shape[0]), int(w_oihw.shape[1])
    kx = np.arange(3)[:, None, None]
    iw = np.arange(w)[None, :, None]
    ow = np.arange(w)[None, None, :]
    sel = jnp.asarray((iw == ow + kx - 1).astype(np.float32))      # (3, w, w)
    band = jnp.einsum("xio,abyx->yiboa", sel, w_oihw.astype(jnp.float32))
    band = band.reshape(3, w * cin, w * cout)
    eye = jnp.eye(nb, dtype=band.dtype)
    band = jnp.einsum("nm,yrc->ynrmc", eye, band)   # block-diag over packed images
    return band.reshape(3, nb * w * cin, nb * w * cout)


def _fold_bn(gamma, beta, rmean, rvar, reps, eps=1e-5):
    scale = gamma / jnp.sqrt(rvar + eps)
    bias = beta - rmean * scale
    return (jnp.tile(scale, reps)[None, :].astype(jnp.float32),
            jnp.tile(bias, reps)[None, :].astype(jnp.float32))


def _pick_images_per_block(n, w, c, max_lanes):
    cands = [d for d in range(1, n + 1) if n % d == 0 and d * w * c <= max_lanes]
    if not cands:
        return 1
    dense = [d for d in cands if (d * w * c) % 128 == 0]
    return max(dense) if dense else max(cands)


def _pick_groups_per_step(g_total, h, row_target, min_grid_steps):
    best = 1
    for cand in range(1, g_total + 1):
        if g_total % cand:
            continue
        if g_total // cand < max(min_grid_steps, 1):
            break
        best = cand
        if cand * h >= row_target:
            break
    return best


def basic_block_forward(x_nchw, params, *, eps=1e-5, compute_dtype=jnp.bfloat16,
                        images_per_block=None, groups_per_step=None,
                        max_lanes=512, row_target=256, min_grid_steps=1,
                        vmem_budget_bytes=44 << 20):
    """x_nchw: (N, C, H, W) float32.  Returns (N, C, H, W) float32.

    compute_dtype: dtype of the matmul operands/activation slab. bfloat16 is the
    recommended default on v5e, v6e and v7x (the MXU is natively bf16 on all of
    them); accumulation and all elementwise math stay in float32.  Note the
    activation slab (and hence the residual) is quantized to compute_dtype.
    On v7x pass min_grid_steps=2 (and/or a smaller images_per_block) so both
    TensorCores get grid steps.
    """
    N, C, H, W = x_nchw.shape
    nb = images_per_block or _pick_images_per_block(N, W, C, max_lanes)
    assert N % nb == 0, "images_per_block must divide the batch"
    g_total = N // nb
    gb = groups_per_step or _pick_groups_per_step(g_total, H, row_target,
                                                  min_grid_steps)
    assert g_total % gb == 0, "groups_per_step must divide N // images_per_block"
    G = g_total // gb
    L = nb * W * C                # lane width (128 for the test shapes)
    hp = H + 2
    rp = gb * hp                  # stacked (H-padded) rows per grid step
    m = rp - 2                    # rows computed/stored per grid step

    f32 = jnp.float32
    cbytes = jnp.dtype(compute_dtype).itemsize

    # ---- VMEM budgeting: gate the dense band, size the scoped limit ----------
    band_bytes = 2 * 3 * L * L * cbytes                    # both conv bands
    act_bytes = 2 * (rp * L * cbytes + m * L * 4)          # double-buffered in/out
    scratch_bytes = 5 * m * L * 4 + 3 * m * L * cbytes     # h + shifted operands
    vmem_needed = 2 * band_bytes + act_bytes + scratch_bytes + (2 << 20)
    if vmem_needed > vmem_budget_bytes:
        # TODO(synk): tiled per-tap CxC matmul fallback for large W*C instead of
        # the dense Toeplitz band (O(W) memory / FLOP inflation).
        raise ValueError(
            f"banded BasicBlock footprint ~{vmem_needed >> 20} MiB exceeds the "
            f"{vmem_budget_bytes >> 20} MiB VMEM budget; reduce max_lanes / "
            "groups_per_step or use bfloat16 compute_dtype.")
    vmem_limit = int(min(max(32 << 20, vmem_needed + (vmem_needed >> 1)), 60 << 20))

    # ---- layout conversion + parameter prep (plain JAX glue) -----------------
    x_nhwc = jnp.transpose(x_nchw, (0, 2, 3, 1))
    xl = x_nhwc.reshape(g_total, nb, H, W, C)
    xl = jnp.transpose(xl, (0, 2, 1, 3, 4)).reshape(g_total, H, L)   # lane-pack
    xl = jnp.pad(xl, ((0, 0), (1, 1), (0, 0)))                       # H pad only
    xs = xl.reshape(G, rp, L).astype(compute_dtype)                  # ship narrow

    w1b = _banded_conv_weight(params["w1"], w=W, nb=nb).astype(compute_dtype)
    w2b = _banded_conv_weight(params["w2"], w=W, nb=nb).astype(compute_dtype)
    s1, b1 = _fold_bn(params["g1"], params["b1"], params["rm1"], params["rv1"],
                      nb * W, eps)
    s2, b2 = _fold_bn(params["g2"], params["b2"], params["rm2"], params["rv2"],
                      nb * W, eps)

    kernel = functools.partial(_basic_block_kernel, hp=hp, gb=gb, h_img=H,
                               compute_dtype=compute_dtype)

    def run(single_buffer_weights):
        def const_spec(shape):
            if single_buffer_weights:
                return pl.BlockSpec(shape, lambda g: (0,) * len(shape),
                                    pipeline_mode=pl.Buffered(1))
            return pl.BlockSpec(shape, lambda g: (0,) * len(shape))

        return pl.pallas_call(
            kernel,
            out_shape=jax.ShapeDtypeStruct((G, m, L), f32),
            grid=(G,),
            in_specs=[
                pl.BlockSpec((1, rp, L), lambda g: (g, 0, 0)),
                const_spec((3, L, L)),
                const_spec((3, L, L)),
                const_spec((1, L)),
                const_spec((1, L)),
                const_spec((1, L)),
                const_spec((1, L)),
            ],
            out_specs=pl.BlockSpec((1, m, L), lambda g: (g, 0, 0)),
            compiler_params=pltpu.CompilerParams(
                dimension_semantics=("parallel",),
                vmem_limit_bytes=vmem_limit),
        )(xs, w1b, w2b, s1, b1, s2, b2)

    try:
        out_flat = run(single_buffer_weights=True)
    except Exception:
        # Single-buffering the constant-index weight/scale blocks is a pure
        # VMEM-footprint optimization; fall back to default double buffering if
        # this JAX/Mosaic build rejects pl.Buffered(1).
        out_flat = run(single_buffer_weights=False)

    # Drop rows sitting at internal H-pad positions, unpack lanes, back to NCHW.
    row_idx = (np.arange(gb)[:, None] * hp + np.arange(H)[None, :]).reshape(-1)
    out = jnp.take(out_flat, jnp.asarray(row_idx), axis=1)    # (G, gb*H, L)
    out = out.reshape(g_total, H, nb, W, C)
    out = jnp.transpose(out, (0, 2, 1, 3, 4)).reshape(N, H, W, C)
    return jnp.transpose(out, (0, 3, 1, 2))


# ---------------- pure-JAX reference (mirrors the PyTorch forward) ------------
def _reference(x, p, eps=1e-5):
    def conv3x3(x, w):
        return jax.lax.conv_general_dilated(
            x, w, window_strides=(1, 1), padding=((1, 1), (1, 1)),
            dimension_numbers=("NCHW", "OIHW", "NCHW"))

    def bn(x, g, b, rm, rv):
        s = g / jnp.sqrt(rv + eps)
        return x * s[None, :, None, None] + (b - rm * s)[None, :, None, None]

    out = conv3x3(x, p["w1"])
    out = jnp.maximum(bn(out, p["g1"], p["b1"], p["rm1"], p["rv1"]), 0.0)
    out = conv3x3(out, p["w2"])
    out = bn(out, p["g2"], p["b2"], p["rm2"], p["rv2"])
    return jnp.maximum(out + x, 0.0)


if __name__ == "__main__":
    N, C, H, W = 2, 4, 16, 16  # inplanes == planes == 4, stride=1, no downsample

    key = jax.random.PRNGKey(0)
    kp, kx, kx2 = jax.random.split(key, 3)
    ks = jax.random.split(kp, 10)

    params = {
        "w1": 0.1 * jax.random.normal(ks[0], (C, C, 3, 3), jnp.float32),
        "g1": 0.5 + jax.random.uniform(ks[1], (C,), jnp.float32),
        "b1": 0.1 * jax.random.normal(ks[2], (C,), jnp.float32),
        "rm1": 0.1 * jax.random.normal(ks[3], (C,), jnp.float32),
        "rv1": 0.5 + jax.random.uniform(ks[4], (C,), jnp.float32),
        "w2": 0.1 * jax.random.normal(ks[5], (C, C, 3, 3), jnp.float32),
        "g2": 0.5 + jax.random.uniform(ks[6], (C,), jnp.float32),
        "b2": 0.1 * jax.random.normal(ks[7], (C,), jnp.float32),
        "rm2": 0.1 * jax.random.normal(ks[8], (C,), jnp.float32),
        "rv2": 0.5 + jax.random.uniform(ks[9], (C,), jnp.float32),
    }
    x = jax.random.normal(kx, (N, C, H, W), jnp.float32)
    ref = jax.block_until_ready(_reference(x, params))

    # f32 matmul path: tight correctness check (lane-dense, single group/step).
    out_f32 = jax.block_until_ready(
        basic_block_forward(x, params, compute_dtype=jnp.float32))
    np.testing.assert_allclose(np.asarray(out_f32), np.asarray(ref),
                               rtol=1e-4, atol=1e-4)

    # bf16 matmul operands (recommended on v5e/v6e/v7x): loose check.
    out_bf16 = jax.block_until_ready(basic_block_forward(x, params))
    np.testing.assert_allclose(np.asarray(out_bf16), np.asarray(ref),
                               rtol=1e-1, atol=1e-1)

    # Row-stacked path (groups_per_step > 1) exercising internal H-pad masking.
    x4 = jax.random.normal(kx2, (4, C, H, W), jnp.float32)
    ref4 = jax.block_until_ready(_reference(x4, params))
    out4 = jax.block_until_ready(
        basic_block_forward(x4, params, compute_dtype=jnp.float32,
                            images_per_block=2, groups_per_step=2))
    np.testing.assert_allclose(np.asarray(out4), np.asarray(ref4),
                               rtol=1e-4, atol=1e-4)

    print("KERNEL_OK")
</pallas_src>

<mosaic_0001>
module attributes {stable_mosaic.version = 11 : i64} {
  func.func @_basic_block_kernel(%arg0: i32, %arg1: memref<1x18x128xf32, #tpu.memory_space<vmem>>, %arg2: memref<3x128x128xf32, #tpu.memory_space<vmem>>, %arg3: memref<3x128x128xf32, #tpu.memory_space<vmem>>, %arg4: memref<1x128xf32, #tpu.memory_space<vmem>>, %arg5: memref<1x128xf32, #tpu.memory_space<vmem>>, %arg6: memref<1x128xf32, #tpu.memory_space<vmem>>, %arg7: memref<1x128xf32, #tpu.memory_space<vmem>>, %arg8: memref<1x16x128xf32, #tpu.memory_space<vmem>>) attributes {dimension_semantics = [#tpu.dimension_semantics<parallel>], iteration_bounds = array<i64: 1>, scalar_prefetch = 0 : i64, scratch_operands = 0 : i64, tpu.core_type = #tpu.core_type<tc>, window_params = [{transform_indices = @transform_0, window_bounds = array<i64: 1, 18, 128>}, {pipeline_mode = #tpu.pipeline_mode<synchronous>, transform_indices = @transform_1, window_bounds = array<i64: 3, 128, 128>}, {pipeline_mode = #tpu.pipeline_mode<synchronous>, transform_indices = @transform_2, window_bounds = array<i64: 3, 128, 128>}, {pipeline_mode = #tpu.pipeline_mode<synchronous>, transform_indices = @transform_3, window_bounds = array<i64: 1, 128>}, {pipeline_mode = #tpu.pipeline_mode<synchronous>, transform_indices = @transform_4, window_bounds = array<i64: 1, 128>}, {pipeline_mode = #tpu.pipeline_mode<synchronous>, transform_indices = @transform_5, window_bounds = array<i64: 1, 128>}, {pipeline_mode = #tpu.pipeline_mode<synchronous>, transform_indices = @transform_6, window_bounds = array<i64: 1, 128>}, {transform_indices = @transform_7, window_bounds = array<i64: 1, 16, 128>}]} {
    %c0 = arith.constant 0 : index
    %c0_0 = arith.constant 0 : index
    %c0_1 = arith.constant 0 : index
    %0 = vector.load %arg1[%c0, %c0_0, %c0_1] : memref<1x18x128xf32, #tpu.memory_space<vmem>>, vector<1x16x128xf32>
    %1 = vector.shape_cast %0 : vector<1x16x128xf32> to vector<16x128xf32>
    %c0_2 = arith.constant 0 : index
    %c1 = arith.constant 1 : index
    %c0_3 = arith.constant 0 : index
    %2 = vector.load %arg1[%c0_2, %c1, %c0_3] : memref<1x18x128xf32, #tpu.memory_space<vmem>>, vector<1x16x128xf32>
    %3 = vector.shape_cast %2 : vector<1x16x128xf32> to vector<16x128xf32>
    %c0_4 = arith.constant 0 : index
    %c2 = arith.constant 2 : index
    %c0_5 = arith.constant 0 : index
    %4 = vector.load %arg1[%c0_4, %c2, %c0_5] : memref<1x18x128xf32, #tpu.memory_space<vmem>>, vector<1x16x128xf32>
    %5 = vector.shape_cast %4 : vector<1x16x128xf32> to vector<16x128xf32>
    %c0_6 = arith.constant 0 : index
    %c0_7 = arith.constant 0 : index
    %c0_8 = arith.constant 0 : index
    %6 = vector.load %arg2[%c0_6, %c0_7, %c0_8] : memref<3x128x128xf32, #tpu.memory_space<vmem>>, vector<1x128x128xf32>
    %7 = vector.shape_cast %6 : vector<1x128x128xf32> to vector<128x128xf32>
    %cst = arith.constant dense<0.000000e+00> : vector<16x128xf32>
    %8 = tpu.matmul %1, %7, %cst {dimension_numbers = #tpu.dot_dimension_numbers<[1], [0], [0], [1], [0, 0, 1, 1], [], []>} : vector<16x128xf32>, vector<128x128xf32>, vector<16x128xf32> -> vector<16x128xf32>
    %c1_9 = arith.constant 1 : index
    %c0_10 = arith.constant 0 : index
    %c0_11 = arith.constant 0 : index
    %9 = vector.load %arg2[%c1_9, %c0_10, %c0_11] : memref<3x128x128xf32, #tpu.memory_space<vmem>>, vector<1x128x128xf32>
    %10 = vector.shape_cast %9 : vector<1x128x128xf32> to vector<128x128xf32>
    %cst_12 = arith.constant dense<0.000000e+00> : vector<16x128xf32>
    %11 = tpu.matmul %3, %10, %cst_12 {dimension_numbers = #tpu.dot_dimension_numbers<[1], [0], [0], [1], [0, 0, 1, 1], [], []>} : vector<16x128xf32>, vector<128x128xf32>, vector<16x128xf32> -> vector<16x128xf32>
    %12 = arith.addf %8, %11 : vector<16x128xf32>
    %c2_13 = arith.constant 2 : index
    %c0_14 = arith.constant 0 : index
    %c0_15 = arith.constant 0 : index
    %13 = vector.load %arg2[%c2_13, %c0_14, %c0_15] : memref<3x128x128xf32, #tpu.memory_space<vmem>>, vector<1x128x128xf32>
    %14 = vector.shape_cast %13 : vector<1x128x128xf32> to vector<128x128xf32>
    %cst_16 = arith.constant dense<0.000000e+00> : vector<16x128xf32>
    %15 = tpu.matmul %5, %14, %cst_16 {dimension_numbers = #tpu.dot_dimension_numbers<[1], [0], [0], [1], [0, 0, 1, 1], [], []>} : vector<16x128xf32>, vector<128x128xf32>, vector<16x128xf32> -> vector<16x128xf32>
    %16 = arith.addf %12, %15 : vector<16x128xf32>
    %c0_17 = arith.constant 0 : index
    %c0_18 = arith.constant 0 : index
    %17 = vector.load %arg4[%c0_17, %c0_18] : memref<1x128xf32, #tpu.memory_space<vmem>>, vector<1x128xf32>
    %18 = vector.shape_cast %17 : vector<1x128xf32> to vector<128xf32>
    %19 = vector.shape_cast %18 : vector<128xf32> to vector<1x128xf32>
    %20 = vector.broadcast %19 : vector<1x128xf32> to vector<16x128xf32>
    %21 = arith.mulf %16, %20 : vector<16x128xf32>
    %c0_19 = arith.constant 0 : index
    %c0_20 = arith.constant 0 : index
    %22 = vector.load %arg5[%c0_19, %c0_20] : memref<1x128xf32, #tpu.memory_space<vmem>>, vector<1x128xf32>
    %23 = vector.shape_cast %22 : vector<1x128xf32> to vector<128xf32>
    %24 = vector.shape_cast %23 : vector<128xf32> to vector<1x128xf32>
    %25 = vector.broadcast %24 : vector<1x128xf32> to vector<16x128xf32>
    %26 = arith.addf %21, %25 : vector<16x128xf32>
    %cst_21 = arith.constant 0.000000e+00 : f32
    %27 = vector.broadcast %cst_21 : f32 to vector<16x128xf32>
    %28 = arith.maximumf %26, %27 : vector<16x128xf32>
    %cst_22 = arith.constant 0.000000e+00 : f32
    %29 = vector.broadcast %cst_22 : f32 to vector<1x128xf32>
    %30 = vector.extract_strided_slice %28 {offsets = [0, 0], sizes = [15, 128], strides = [1, 1]} : vector<16x128xf32> to vector<15x128xf32>
    %31 = tpu.concatenate %29, %30 in 0 : vector<1x128xf32>, vector<15x128xf32> -> vector<16x128xf32>
    %32 = vector.extract_strided_slice %28 {offsets = [1, 0], sizes = [15, 128], strides = [1, 1]} : vector<16x128xf32> to vector<15x128xf32>
    %33 = tpu.concatenate %32, %29 in 0 : vector<15x128xf32>, vector<1x128xf32> -> vector<16x128xf32>
    %c0_23 = arith.constant 0 : index
    %c0_24 = arith.constant 0 : index
    %c0_25 = arith.constant 0 : index
    %34 = vector.load %arg3[%c0_23, %c0_24, %c0_25] : memref<3x128x128xf32, #tpu.memory_space<vmem>>, vector<1x128x128xf32>
    %35 = vector.shape_cast %34 : vector<1x128x128xf32> to vector<128x128xf32>
    %cst_26 = arith.constant dense<0.000000e+00> : vector<16x128xf32>
    %36 = tpu.matmul %31, %35, %cst_26 {dimension_numbers = #tpu.dot_dimension_numbers<[1], [0], [0], [1], [0, 0, 1, 1], [], []>} : vector<16x128xf32>, vector<128x128xf32>, vector<16x128xf32> -> vector<16x128xf32>
    %c1_27 = arith.constant 1 : index
    %c0_28 = arith.constant 0 : index
    %c0_29 = arith.constant 0 : index
    %37 = vector.load %arg3[%c1_27, %c0_28, %c0_29] : memref<3x128x128xf32, #tpu.memory_space<vmem>>, vector<1x128x128xf32>
    %38 = vector.shape_cast %37 : vector<1x128x128xf32> to vector<128x128xf32>
    %cst_30 = arith.constant dense<0.000000e+00> : vector<16x128xf32>
    %39 = tpu.matmul %28, %38, %cst_30 {dimension_numbers = #tpu.dot_dimension_numbers<[1], [0], [0], [1], [0, 0, 1, 1], [], []>} : vector<16x128xf32>, vector<128x128xf32>, vector<16x128xf32> -> vector<16x128xf32>
    %40 = arith.addf %36, %39 : vector<16x128xf32>
    %c2_31 = arith.constant 2 : index
    %c0_32 = arith.constant 0 : index
    %c0_33 = arith.constant 0 : index
    %41 = vector.load %arg3[%c2_31, %c0_32, %c0_33] : memref<3x128x128xf32, #tpu.memory_space<vmem>>, vector<1x128x128xf32>
    %42 = vector.shape_cast %41 : vector<1x128x128xf32> to vector<128x128xf32>
    %cst_34 = arith.constant dense<0.000000e+00> : vector<16x128xf32>
    %43 = tpu.matmul %33, %42, %cst_34 {dimension_numbers = #tpu.dot_dimension_numbers<[1], [0], [0], [1], [0, 0, 1, 1], [], []>} : vector<16x128xf32>, vector<128x128xf32>, vector<16x128xf32> -> vector<16x128xf32>
    %44 = arith.addf %40, %43 : vector<16x128xf32>
    %c0_35 = arith.constant 0 : index
    %c0_36 = arith.constant 0 : index
    %45 = vector.load %arg6[%c0_35, %c0_36] : memref<1x128xf32, #tpu.memory_space<vmem>>, vector<1x128xf32>
    %46 = vector.shape_cast %45 : vector<1x128xf32> to vector<128xf32>
    %47 = vector.shape_cast %46 : vector<128xf32> to vector<1x128xf32>
    %48 = vector.broadcast %47 : vector<1x128xf32> to vector<16x128xf32>
    %49 = arith.mulf %44, %48 : vector<16x128xf32>
    %c0_37 = arith.constant 0 : index
    %c0_38 = arith.constant 0 : index
    %50 = vector.load %arg7[%c0_37, %c0_38] : memref<1x128xf32, #tpu.memory_space<vmem>>, vector<1x128xf32>
    %51 = vector.shape_cast %50 : vector<1x128xf32> to vector<128xf32>
    %52 = vector.shape_cast %51 : vector<128xf32> to vector<1x128xf32>
    %53 = vector.broadcast %52 : vector<1x128xf32> to vector<16x128xf32>
    %54 = arith.addf %49, %53 : vector<16x128xf32>
    %55 = arith.addf %54, %3 : vector<16x128xf32>
    %cst_39 = arith.constant 0.000000e+00 : f32
    %56 = vector.broadcast %cst_39 : f32 to vector<16x128xf32>
    %57 = arith.maximumf %55, %56 : vector<16x128xf32>
    %c0_40 = arith.constant 0 : index
    %c0_41 = arith.constant 0 : index
    %c0_42 = arith.constant 0 : index
    %58 = vector.load %arg8[%c0_40, %c0_41, %c0_42] : memref<1x16x128xf32, #tpu.memory_space<vmem>>, vector<1x16x128xf32>
    %59 = vector.shape_cast %58 : vector<1x16x128xf32> to vector<16x128xf32>
    %60 = vector.shape_cast %57 : vector<16x128xf32> to vector<1x16x128xf32>
    tpu.vector_store %arg8[%c0_40, %c0_41, %c0_42], %60 {strides = array<i32>} : memref<1x16x128xf32, #tpu.memory_space<vmem>>, vector<1x16x128xf32>,
    return
  }
  func.func @transform_0(%arg0: i32) -> (i32, i32, i32) {
    %c0_i32 = arith.constant 0 : i32
    %c0_i32_0 = arith.constant 0 : i32
    %c0_i32_1 = arith.constant 0 : i32
    return %arg0, %c0_i32, %c0_i32_0 : i32, i32, i32
  }
  func.func @transform_1(%arg0: i32) -> (i32, i32, i32) {
    %c0_i32 = arith.constant 0 : i32
    %c0_i32_0 = arith.constant 0 : i32
    %c0_i32_1 = arith.constant 0 : i32
    %c0_i32_2 = arith.constant 0 : i32
    return %c0_i32, %c0_i32_0, %c0_i32_1 : i32, i32, i32
  }
  func.func @transform_2(%arg0: i32) -> (i32, i32, i32) {
    %c0_i32 = arith.constant 0 : i32
    %c0_i32_0 = arith.constant 0 : i32
    %c0_i32_1 = arith.constant 0 : i32
    %c0_i32_2 = arith.constant 0 : i32
    return %c0_i32, %c0_i32_0, %c0_i32_1 : i32, i32, i32
  }
  func.func @transform_3(%arg0: i32) -> (i32, i32) {
    %c0_i32 = arith.constant 0 : i32
    %c0_i32_0 = arith.constant 0 : i32
    %c0_i32_1 = arith.constant 0 : i32
    return %c0_i32, %c0_i32_0 : i32, i32
  }
  func.func @transform_4(%arg0: i32) -> (i32, i32) {
    %c0_i32 = arith.constant 0 : i32
    %c0_i32_0 = arith.constant 0 : i32
    %c0_i32_1 = arith.constant 0 : i32
    return %c0_i32, %c0_i32_0 : i32, i32
  }
  func.func @transform_5(%arg0: i32) -> (i32, i32) {
    %c0_i32 = arith.constant 0 : i32
    %c0_i32_0 = arith.constant 0 : i32
    %c0_i32_1 = arith.constant 0 : i32
    return %c0_i32, %c0_i32_0 : i32, i32
  }
  func.func @transform_6(%arg0: i32) -> (i32, i32) {
    %c0_i32 = arith.constant 0 : i32
    %c0_i32_0 = arith.constant 0 : i32
    %c0_i32_1 = arith.constant 0 : i32
    return %c0_i32, %c0_i32_0 : i32, i32
  }
  func.func @transform_7(%arg0: i32) -> (i32, i32, i32) {
    %c0_i32 = arith.constant 0 : i32
    %c0_i32_0 = arith.constant 0 : i32
    %c0_i32_1 = arith.constant 0 : i32
    return %arg0, %c0_i32, %c0_i32_0 : i32, i32, i32
  }
}

module attributes {stable_mosaic.version = 11 : i64} {
  func.func @_basic_block_kernel(%arg0: i32, %arg1: memref<1x18x128xf32, #tpu.memory_space<vmem>>, %arg2: memref<3x128x128xf32, #tpu.memory_space<vmem>>, %arg3: memref<3x128x128xf32, #tpu.memory_space<vmem>>, %arg4: memref<1x128xf32, #tpu.memory_space<vmem>>, %arg5: memref<1x128xf32, #tpu.memory_space<vmem>>, %arg6: memref<1x128xf32, #tpu.memory_space<vmem>>, %arg7: memref<1x128xf32, #tpu.memory_space<vmem>>, %arg8: memref<1x16x128xf32, #tpu.memory_space<vmem>>) attributes {dimension_semantics = [#tpu.dimension_semantics<parallel>], iteration_bounds = array<i64: 1>, scalar_prefetch = 0 : i64, scratch_operands = 0 : i64, tpu.core_type = #tpu.core_type<tc>, window_params = [{transform_indices = @transform_0, window_bounds = array<i64: 1, 18, 128>}, {pipeline_mode = #tpu.pipeline_mode<synchronous>, transform_indices = @transform_1, window_bounds = array<i64: 3, 128, 128>}, {pipeline_mode = #tpu.pipeline_mode<synchronous>, transform_indices = @transform_2, window_bounds = array<i64: 3, 128, 128>}, {pipeline_mode = #tpu.pipeline_mode<synchronous>, transform_indices = @transform_3, window_bounds = array<i64: 1, 128>}, {pipeline_mode = #tpu.pipeline_mode<synchronous>, transform_indices = @transform_4, window_bounds = array<i64: 1, 128>}, {pipeline_mode = #tpu.pipeline_mode<synchronous>, transform_indices = @transform_5, window_bounds = array<i64: 1, 128>}, {pipeline_mode = #tpu.pipeline_mode<synchronous>, transform_indices = @transform_6, window_bounds = array<i64: 1, 128>}, {transform_indices = @transform_7, window_bounds = array<i64: 1, 16, 128>}]} {
    %c0 = arith.constant 0 : index
    %c0_0 = arith.constant 0 : index
    %c0_1 = arith.constant 0 : index
    %0 = vector.load %arg1[%c0, %c0_0, %c0_1] : memref<1x18x128xf32, #tpu.memory_space<vmem>>, vector<1x16x128xf32>
    %1 = vector.shape_cast %0 : vector<1x16x128xf32> to vector<16x128xf32>
    %c0_2 = arith.constant 0 : index
    %c1 = arith.constant 1 : index
    %c0_3 = arith.constant 0 : index
    %2 = vector.load %arg1[%c0_2, %c1, %c0_3] : memref<1x18x128xf32, #tpu.memory_space<vmem>>, vector<1x16x128xf32>
    %3 = vector.shape_cast %2 : vector<1x16x128xf32> to vector<16x128xf32>
    %c0_4 = arith.constant 0 : index
    %c2 = arith.constant 2 : index
    %c0_5 = arith.constant 0 : index
    %4 = vector.load %arg1[%c0_4, %c2, %c0_5] : memref<1x18x128xf32, #tpu.memory_space<vmem>>, vector<1x16x128xf32>
    %5 = vector.shape_cast %4 : vector<1x16x128xf32> to vector<16x128xf32>
    %c0_6 = arith.constant 0 : index
    %c0_7 = arith.constant 0 : index
    %c0_8 = arith.constant 0 : index
    %6 = vector.load %arg2[%c0_6, %c0_7, %c0_8] : memref<3x128x128xf32, #tpu.memory_space<vmem>>, vector<1x128x128xf32>
    %7 = vector.shape_cast %6 : vector<1x128x128xf32> to vector<128x128xf32>
    %cst = arith.constant dense<0.000000e+00> : vector<16x128xf32>
    %8 = tpu.matmul %1, %7, %cst {dimension_numbers = #tpu.dot_dimension_numbers<[1], [0], [0], [1], [0, 0, 1, 1], [], []>} : vector<16x128xf32>, vector<128x128xf32>, vector<16x128xf32> -> vector<16x128xf32>
    %c1_9 = arith.constant 1 : index
    %c0_10 = arith.constant 0 : index
    %c0_11 = arith.constant 0 : index
    %9 = vector.load %arg2[%c1_9, %c0_10, %c0_11] : memref<3x128x128xf32, #tpu.memory_space<vmem>>, vector<1x128x128xf32>
    %10 = vector.shape_cast %9 : vector<1x128x128xf32> to vector<128x128xf32>
    %cst_12 = arith.constant dense<0.000000e+00> : vector<16x128xf32>
    %11 = tpu.matmul %3, %10, %cst_12 {dimension_numbers = #tpu.dot_dimension_numbers<[1], [0], [0], [1], [0, 0, 1, 1], [], []>} : vector<16x128xf32>, vector<128x128xf32>, vector<16x128xf32> -> vector<16x128xf32>
    %12 = arith.addf %8, %11 : vector<16x128xf32>
    %c2_13 = arith.constant 2 : index
    %c0_14 = arith.constant 0 : index
    %c0_15 = arith.constant 0 : index
    %13 = vector.load %arg2[%c2_13, %c0_14, %c0_15] : memref<3x128x128xf32, #tpu.memory_space<vmem>>, vector<1x128x128xf32>
    %14 = vector.shape_cast %13 : vector<1x128x128xf32> to vector<128x128xf32>
    %cst_16 = arith.constant dense<0.000000e+00> : vector<16x128xf32>
    %15 = tpu.matmul %5, %14, %cst_16 {dimension_numbers = #tpu.dot_dimension_numbers<[1], [0], [0], [1], [0, 0, 1, 1], [], []>} : vector<16x128xf32>, vector<128x128xf32>, vector<16x128xf32> -> vector<16x128xf32>
    %16 = arith.addf %12, %15 : vector<16x128xf32>
    %c0_17 = arith.constant 0 : index
    %c0_18 = arith.constant 0 : index
    %17 = vector.load %arg4[%c0_17, %c0_18] : memref<1x128xf32, #tpu.memory_space<vmem>>, vector<1x128xf32>
    %18 = vector.shape_cast %17 : vector<1x128xf32> to vector<128xf32>
    %19 = vector.shape_cast %18 : vector<128xf32> to vector<1x128xf32>
    %20 = vector.broadcast %19 : vector<1x128xf32> to vector<16x128xf32>
    %21 = arith.mulf %16, %20 : vector<16x128xf32>
    %c0_19 = arith.constant 0 : index
    %c0_20 = arith.constant 0 : index
    %22 = vector.load %arg5[%c0_19, %c0_20] : memref<1x128xf32, #tpu.memory_space<vmem>>, vector<1x128xf32>
    %23 = vector.shape_cast %22 : vector<1x128xf32> to vector<128xf32>
    %24 = vector.shape_cast %23 : vector<128xf32> to vector<1x128xf32>
    %25 = vector.broadcast %24 : vector<1x128xf32> to vector<16x128xf32>
    %26 = arith.addf %21, %25 : vector<16x128xf32>
    %cst_21 = arith.constant 0.000000e+00 : f32
    %27 = vector.broadcast %cst_21 : f32 to vector<16x128xf32>
    %28 = arith.maximumf %26, %27 : vector<16x128xf32>
    %cst_22 = arith.constant 0.000000e+00 : f32
    %29 = vector.broadcast %cst_22 : f32 to vector<1x128xf32>
    %30 = vector.extract_strided_slice %28 {offsets = [0, 0], sizes = [15, 128], strides = [1, 1]} : vector<16x128xf32> to vector<15x128xf32>
    %31 = tpu.concatenate %29, %30 in 0 : vector<1x128xf32>, vector<15x128xf32> -> vector<16x128xf32>
    %32 = vector.extract_strided_slice %28 {offsets = [1, 0], sizes = [15, 128], strides = [1, 1]} : vector<16x128xf32> to vector<15x128xf32>
    %33 = tpu.concatenate %32, %29 in 0 : vector<15x128xf32>, vector<1x128xf32> -> vector<16x128xf32>
    %c0_23 = arith.constant 0 : index
    %c0_24 = arith.constant 0 : index
    %c0_25 = arith.constant 0 : index
    %34 = vector.load %arg3[%c0_23, %c0_24, %c0_25] : memref<3x128x128xf32, #tpu.memory_space<vmem>>, vector<1x128x128xf32>
    %35 = vector.shape_cast %34 : vector<1x128x128xf32> to vector<128x128xf32>
    %cst_26 = arith.constant dense<0.000000e+00> : vector<16x128xf32>
    %36 = tpu.matmul %31, %35, %cst_26 {dimension_numbers = #tpu.dot_dimension_numbers<[1], [0], [0], [1], [0, 0, 1, 1], [], []>} : vector<16x128xf32>, vector<128x128xf32>, vector<16x128xf32> -> vector<16x128xf32>
    %c1_27 = arith.constant 1 : index
    %c0_28 = arith.constant 0 : index
    %c0_29 = arith.constant 0 : index
    %37 = vector.load %arg3[%c1_27, %c0_28, %c0_29] : memref<3x128x128xf32, #tpu.memory_space<vmem>>, vector<1x128x128xf32>
    %38 = vector.shape_cast %37 : vector<1x128x128xf32> to vector<128x128xf32>
    %cst_30 = arith.constant dense<0.000000e+00> : vector<16x128xf32>
    %39 = tpu.matmul %28, %38, %cst_30 {dimension_numbers = #tpu.dot_dimension_numbers<[1], [0], [0], [1], [0, 0, 1, 1], [], []>} : vector<16x128xf32>, vector<128x128xf32>, vector<16x128xf32> -> vector<16x128xf32>
    %40 = arith.addf %36, %39 : vector<16x128xf32>
    %c2_31 = arith.constant 2 : index
    %c0_32 = arith.constant 0 : index
    %c0_33 = arith.constant 0 : index
    %41 = vector.load %arg3[%c2_31, %c0_32, %c0_33] : memref<3x128x128xf32, #tpu.memory_space<vmem>>, vector<1x128x128xf32>
    %42 = vector.shape_cast %41 : vector<1x128x128xf32> to vector<128x128xf32>
    %cst_34 = arith.constant dense<0.000000e+00> : vector<16x128xf32>
    %43 = tpu.matmul %33, %42, %cst_34 {dimension_numbers = #tpu.dot_dimension_numbers<[1], [0], [0], [1], [0, 0, 1, 1], [], []>} : vector<16x128xf32>, vector<128x128xf32>, vector<16x128xf32> -> vector<16x128xf32>
    %44 = arith.addf %40, %43 : vector<16x128xf32>
    %c0_35 = arith.constant 0 : index
    %c0_36 = arith.constant 0 : index
    %45 = vector.load %arg6[%c0_35, %c0_36] : memref<1x128xf32, #tpu.memory_space<vmem>>, vector<1x128xf32>
    %46 = vector.shape_cast %45 : vector<1x128xf32> to vector<128xf32>
    %47 = vector.shape_cast %46 : vector<128xf32> to vector<1x128xf32>
    %48 = vector.broadcast %47 : vector<1x128xf32> to vector<16x128xf32>
    %49 = arith.mulf %44, %48 : vector<16x128xf32>
    %c0_37 = arith.constant 0 : index
    %c0_38 = arith.constant 0 : index
    %50 = vector.load %arg7[%c0_37, %c0_38] : memref<1x128xf32, #tpu.memory_space<vmem>>, vector<1x128xf32>
    %51 = vector.shape_cast %50 : vector<1x128xf32> to vector<128xf32>
    %52 = vector.shape_cast %51 : vector<128xf32> to vector<1x128xf32>
    %53 = vector.broadcast %52 : vector<1x128xf32> to vector<16x128xf32>
    %54 = arith.addf %49, %53 : vector<16x128xf32>
    %55 = arith.addf %54, %3 : vector<16x128xf32>
    %cst_39 = arith.constant 0.000000e+00 : f32
    %56 = vector.broadcast %cst_39 : f32 to vector<16x128xf32>
    %57 = arith.maximumf %55, %56 : vector<16x128xf32>
    %c0_40 = arith.constant 0 : index
    %c0_41 = arith.constant 0 : index
    %c0_42 = arith.constant 0 : index
    %58 = vector.load %arg8[%c0_40, %c0_41, %c0_42] : memref<1x16x128xf32, #tpu.memory_space<vmem>>, vector<1x16x128xf32>
    %59 = vector.shape_cast %58 : vector<1x16x128xf32> to vector<16x128xf32>
    %60 = vector.shape_cast %57 : vector<16x128xf32> to vector<1x16x128xf32>
    tpu.vector_store %arg8[%c0_40, %c0_41, %c0_42], %60 {strides = array<i32>} : memref<1x16x128xf32, #tpu.memory_space<vmem>>, vector<1x16x128xf32>,
    return
  }
  func.func @transform_0(%arg0: i32) -> (i32, i32, i32) {
    %c0_i32 = arith.constant 0 : i32
    %c0_i32_0 = arith.constant 0 : i32
    %c0_i32_1 = arith.constant 0 : i32
    return %arg0, %c0_i32, %c0_i32_0 : i32, i32, i32
  }
  func.func @transform_1(%arg0: i32) -> (i32, i32, i32) {
    %c0_i32 = arith.constant 0 : i32
    %c0_i32_0 = arith.constant 0 : i32
    %c0_i32_1 = arith.constant 0 : i32
    %c0_i32_2 = arith.constant 0 : i32
    return %c0_i32, %c0_i32_0, %c0_i32_1 : i32, i32, i32
  }
  func.func @transform_2(%arg0: i32) -> (i32, i32, i32) {
    %c0_i32 = arith.constant 0 : i32
    %c0_i32_0 = arith.constant 0 : i32
    %c0_i32_1 = arith.constant 0 : i32
    %c0_i32_2 = arith.constant 0 : i32
    return %c0_i32, %c0_i32_0, %c0_i32_1 : i32, i32, i32
  }
  func.func @transform_3(%arg0: i32) -> (i32, i32) {
    %c0_i32 = arith.constant 0 : i32
    %c0_i32_0 = arith.constant 0 : i32
    %c0_i32_1 = arith.constant 0 : i32
    return %c0_i32, %c0_i32_0 : i32, i32
  }
  func.func @transform_4(%arg0: i32) -> (i32, i32) {
    %c0_i32 = arith.constant 0 : i32
    %c0_i32_0 = arith.constant 0 : i32
    %c0_i32_1 = arith.constant 0 : i32
    return %c0_i32, %c0_i32_0 : i32, i32
  }
  func.func @transform_5(%arg0: i32) -> (i32, i32) {
    %c0_i32 = arith.constant 0 : i32
    %c0_i32_0 = arith.constant 0 : i32
    %c0_i32_1 = arith.constant 0 : i32
    return %c0_i32, %c0_i32_0 : i32, i32
  }
  func.func @transform_6(%arg0: i32) -> (i32, i32) {
    %c0_i32 = arith.constant 0 : i32
    %c0_i32_0 = arith.constant 0 : i32
    %c0_i32_1 = arith.constant 0 : i32
    return %c0_i32, %c0_i32_0 : i32, i32
  }
  func.func @transform_7(%arg0: i32) -> (i32, i32, i32) {
    %c0_i32 = arith.constant 0 : i32
    %c0_i32_0 = arith.constant 0 : i32
    %c0_i32_1 = arith.constant 0 : i32
    return %arg0, %c0_i32, %c0_i32_0 : i32, i32, i32
  }
}

</mosaic_0001>

<llo_original>
// kernel: tpu_custom_call.1
$region0: #{tpu_custom_call.1}
  #allocation0 [shape = 'u32[]', space=smem, size = 0x4, offset = 0x4, fixed_abs, tag = 'smem constant byte address 0x4 - core index']
  #allocation1 [shape = 'u32[72,128]{1,0:T(1,128)}', space=vmem, size = 0x9000, scoped, tag = 'internal scratch']
  %s0 = inlined_call_operand.vmem [shape: f32[1,18,128], index: 0, kind: input, shape index: {}]
  %s1 = inlined_call_operand.hbm [shape: f32[3,128,128], index: 1, kind: input, shape index: {}]
  %s2 = inlined_call_operand.hbm [shape: f32[3,128,128], index: 2, kind: input, shape index: {}]
  %s3 = inlined_call_operand.vmem [shape: f32[1,128], index: 3, kind: input, shape index: {}]
  %s4 = inlined_call_operand.vmem [shape: f32[1,128], index: 4, kind: input, shape index: {}]
  %s5 = inlined_call_operand.vmem [shape: f32[1,128], index: 5, kind: input, shape index: {}]
  %s6 = inlined_call_operand.vmem [shape: f32[1,128], index: 6, kind: input, shape index: {}]
  %s7 = inlined_call_operand.hbm [shape: f32[1,16,128], index: 7, kind: output, shape index: {}]
  %s8 = sld [smem:[#allocation0]]
  $region46: #{tpu_custom_call.1} parent=0
    _
  %s10 = ssub.s32 1, %s8
  %s11 = scalar_select 0, %s10, %s8
  $region1: #{tpu_custom_call.1} parent=0
    #allocation2 [shape = 'u8[196608]{0}', space=vmem, size = 0x30000, scoped, tag = 'input window, operand 1, single buffered']
    #allocation3 [shape = 's32[1]{0}', space=sflag, size = 0x4, scoped, tag = 'scoped memory for tpu_custom_call.1']
    #allocation4 [shape = 's32[1]{0}', space=sflag, size = 0x4, scoped, tag = 'scoped memory for tpu_custom_call.1']
    #allocation5 [shape = 'u8[196608]{0}', space=vmem, size = 0x30000, scoped, tag = 'input window, operand 2, single buffered']
    #allocation6 [shape = 's32[1]{0}', space=sflag, size = 0x4, scoped, tag = 'scoped memory for tpu_custom_call.1']
    #allocation7 [shape = 'u8[8192]{0}', space=vmem, size = 0x2000, scoped, tag = 'output window, operand 0, single buffered']
    %12 = vsyncpa [#allocation3], 0
    %13 = vsyncpa [#allocation6], 0
    %14 = vsyncpa [#allocation4], 0
    // Predicated region
    $region2: #{tpu_custom_call.1} parent=1 // pred_check
      _
    $region3: #{tpu_custom_call.1} parent=1 // pred_check_branch
      %16 = sbr.rel (0) target = $region5
    $region4: #{tpu_custom_call.1} parent=1 // pred_region
      _
    $region5: #{tpu_custom_call.1} parent=1 // pred_fallthru
      _
    // Predicated region
    $region6: #{tpu_custom_call.1} parent=1 // pred_check
      _
    $region7: #{tpu_custom_call.1} parent=1 // pred_check_branch
      %18 = sbr.rel (0) target = $region9
    $region8: #{tpu_custom_call.1} parent=1 // pred_region
      %20 = vsyncadd [#allocation3], 0
      %s21 = sshll.u32 %s1, 4
      %s22 = int_to_ptr.hbm [resolvable:$true] %s21
      %s23 = sshll.u32 [#allocation2], 4
      %s24 = int_to_ptr.vmem [resolvable:$true] %s23
      %29 = dma.hbm_to_vmem [thread:$0]  %s22, 6144, %s24, [#allocation3], 128, 128, 8
    $region9: #{tpu_custom_call.1} parent=1 // pred_fallthru
      _
    // Predicated region
    $region10: #{tpu_custom_call.1} parent=1 // pred_check
      _
    $region11: #{tpu_custom_call.1} parent=1 // pred_check_branch
      %31 = sbr.rel (0) target = $region13
    $region12: #{tpu_custom_call.1} parent=1 // pred_region
      %33 = vsyncadd [#allocation6], 0
      %s34 = sshll.u32 %s2, 4
      %s35 = int_to_ptr.hbm [resolvable:$true] %s34
      %s36 = sshll.u32 [#allocation5], 4
      %s37 = int_to_ptr.vmem [resolvable:$true] %s36
      %42 = dma.hbm_to_vmem [thread:$0]  %s35, 6144, %s37, [#allocation6], 128, 128, 8
    $region13: #{tpu_custom_call.1} parent=1 // pred_fallthru
      _
    // Predicated region
    $region14: #{tpu_custom_call.1} parent=1 // pred_check
      _
    $region15: #{tpu_custom_call.1} parent=1 // pred_check_branch
      %44 = sbr.rel (0) target = $region17
    $region16: #{tpu_custom_call.1} parent=1 // pred_region
      _
    $region17: #{tpu_custom_call.1} parent=1 // pred_fallthru
      _
    // Predicated region
    $region18: #{tpu_custom_call.1} parent=1 // pred_check
      _
    $region19: #{tpu_custom_call.1} parent=1 // pred_check_branch
      %46 = sbr.rel (0) target = $region21
    $region20: #{tpu_custom_call.1} parent=1 // pred_region
      _
    $region21: #{tpu_custom_call.1} parent=1 // pred_fallthru
      _
    // Predicated region
    $region22: #{tpu_custom_call.1} parent=1 // pred_check
      _
    $region23: #{tpu_custom_call.1} parent=1 // pred_check_branch
      %48 = sbr.rel (0) target = $region25
    $region24: #{tpu_custom_call.1} parent=1 // pred_region
      _
    $region25: #{tpu_custom_call.1} parent=1 // pred_fallthru
      _
    // Predicated region
    $region26: #{tpu_custom_call.1} parent=1 // pred_check
      _
    $region27: #{tpu_custom_call.1} parent=1 // pred_check_branch
      %50 = sbr.rel (0) target = $region29
    $region28: #{tpu_custom_call.1} parent=1 // pred_region
      _
    $region29: #{tpu_custom_call.1} parent=1 // pred_fallthru
      _
    // Predicated region
    $region30: #{tpu_custom_call.1} parent=1 // pred_check
      _
    $region31: #{tpu_custom_call.1} parent=1 // pred_check_branch
      %52 = sbr.rel (0) target = $region33
    $region32: #{tpu_custom_call.1} parent=1 // pred_region
      %54 = dma.done [#allocation3], 6144
    $region33: #{tpu_custom_call.1} parent=1 // pred_fallthru
      _
    // Predicated region
    $region34: #{tpu_custom_call.1} parent=1 // pred_check
      _
    $region35: #{tpu_custom_call.1} parent=1 // pred_check_branch
      %56 = sbr.rel (0) target = $region37
    $region36: #{tpu_custom_call.1} parent=1 // pred_region
      %58 = dma.done [#allocation6], 6144
    $region37: #{tpu_custom_call.1} parent=1 // pred_fallthru
      _
    %v59 = vld [vmem:[%s0] sm:$0xff]
    %v60 = vld [vmem:[%s0 + $0x8] sm:$0xff]
    %v61 = vld [vmem:[%s0 + $0x1] sm:$0xff]
    %v62 = vld [vmem:[%s0 + $0x9] sm:$0xff]
    %v63 = vld [vmem:[%s0 + $0x2] sm:$0xff]
    %v64 = vld [vmem:[%s0 + $0xa] sm:$0xff]
    %v65 = vld [vmem:[#allocation2] sm:$0xff]
    %v66 = vld [vmem:[#allocation2 + $0x8] sm:$0xff]
    %v67 = vld [vmem:[#allocation2 + $0x10] sm:$0xff]
    %v68 = vld [vmem:[#allocation2 + $0x18] sm:$0xff]
    %v69 = vld [vmem:[#allocation2 + $0x20] sm:$0xff]
    %v70 = vld [vmem:[#allocation2 + $0x28] sm:$0xff]
    %v71 = vld [vmem:[#allocation2 + $0x30] sm:$0xff]
    %v72 = vld [vmem:[#allocation2 + $0x38] sm:$0xff]
    %v73 = vld [vmem:[#allocation2 + $0x40] sm:$0xff]
    %v74 = vld [vmem:[#allocation2 + $0x48] sm:$0xff]
    %v75 = vld [vmem:[#allocation2 + $0x50] sm:$0xff]
    %v76 = vld [vmem:[#allocation2 + $0x58] sm:$0xff]
    %v77 = vld [vmem:[#allocation2 + $0x60] sm:$0xff]
    %v78 = vld [vmem:[#allocation2 + $0x68] sm:$0xff]
    %v79 = vld [vmem:[#allocation2 + $0x70] sm:$0xff]
    %v80 = vld [vmem:[#allocation2 + $0x78] sm:$0xff]
    %s81 = scalar_lea.vmem [#allocation2], 128
    %v82 = vld [vmem:[%s81] sm:$0xff]
    %v83 = vld [vmem:[%s81 + $0x8] sm:$0xff]
    %v84 = vld [vmem:[%s81 + $0x10] sm:$0xff]
    %v85 = vld [vmem:[%s81 + $0x18] sm:$0xff]
    %v86 = vld [vmem:[%s81 + $0x20] sm:$0xff]
    %v87 = vld [vmem:[%s81 + $0x28] sm:$0xff]
    %v88 = vld [vmem:[%s81 + $0x30] sm:$0xff]
    %v89 = vld [vmem:[%s81 + $0x38] sm:$0xff]
    %v90 = vld [vmem:[%s81 + $0x40] sm:$0xff]
    %v91 = vld [vmem:[%s81 + $0x48] sm:$0xff]
    %v92 = vld [vmem:[%s81 + $0x50] sm:$0xff]
    %v93 = vld [vmem:[%s81 + $0x58] sm:$0xff]
    %v94 = vld [vmem:[%s81 + $0x60] sm:$0xff]
    %v95 = vld [vmem:[%s81 + $0x68] sm:$0xff]
    %v96 = vld [vmem:[%s81 + $0x70] sm:$0xff]
    %v97 = vld [vmem:[%s81 + $0x78] sm:$0xff]
    %98 = vmatpush.msra.mxu0 %v97
    %99 = vmatpush.msra.mxu0 %v96
    %100 = vmatpush.msra.mxu0 %v95
    %101 = vmatpush.msra.mxu0 %v94
    %102 = vmatpush.msra.mxu0 %v93
    %103 = vmatpush.msra.mxu0 %v92
    %104 = vmatpush.msra.mxu0 %v91
    %105 = vmatpush.msra.mxu0 %v90
    %106 = vmatpush.msra.mxu0 %v89
    %107 = vmatpush.msra.mxu0 %v88
    %108 = vmatpush.msra.mxu0 %v87
    %109 = vmatpush.msra.mxu0 %v86
    %110 = vmatpush.msra.mxu0 %v85
    %111 = vmatpush.msra.mxu0 %v84
    %112 = vmatpush.msra.mxu0 %v83
    %113 = vmatpush.msra.mxu0 %v82
    %114 = vmatmul.f32.gmra.mxu0 %v61
    %v115 = vpop.f32.mrf.mxu0
    %v116 = vadd.f32 0.0, %v115
    %117 = vmatmul.f32.gmra.mxu0 %v62
    %v118 = vpop.f32.mrf.mxu0
    %v119 = vadd.f32 0.0, %v118
    %120 = vdwg.mxu0
    %121 = vmatpush.msra.mxu0 %v80
    %122 = vmatpush.msra.mxu0 %v79
    %123 = vmatpush.msra.mxu0 %v78
    %124 = vmatpush.msra.mxu0 %v77
    %125 = vmatpush.msra.mxu0 %v76
    %126 = vmatpush.msra.mxu0 %v75
    %127 = vmatpush.msra.mxu0 %v74
    %128 = vmatpush.msra.mxu0 %v73
    %129 = vmatpush.msra.mxu0 %v72
    %130 = vmatpush.msra.mxu0 %v71
    %131 = vmatpush.msra.mxu0 %v70
    %132 = vmatpush.msra.mxu0 %v69
    %133 = vmatpush.msra.mxu0 %v68
    %134 = vmatpush.msra.mxu0 %v67
    %135 = vmatpush.msra.mxu0 %v66
    %136 = vmatpush.msra.mxu0 %v65
    %137 = vmatmul.f32.gmra.mxu0 %v59
    %v138 = vpop.f32.mrf.mxu0
    %v139 = vadd.f32 %v116, %v138
    %140 = vmatmul.f32.gmra.mxu0 %v60
    %v141 = vpop.f32.mrf.mxu0
    %v142 = vadd.f32 %v119, %v141
    %143 = vdwg.mxu0
    %s144 = scalar_lea.vmem [#allocation2], 256
    %v145 = vld [vmem:[%s144] sm:$0xff]
    %v146 = vld [vmem:[%s144 + $0x8] sm:$0xff]
    %v147 = vld [vmem:[%s144 + $0x10] sm:$0xff]
    %v148 = vld [vmem:[%s144 + $0x18] sm:$0xff]
    %v149 = vld [vmem:[%s144 + $0x20] sm:$0xff]
    %v150 = vld [vmem:[%s144 + $0x28] sm:$0xff]
    %v151 = vld [vmem:[%s144 + $0x30] sm:$0xff]
    %v152 = vld [vmem:[%s144 + $0x38] sm:$0xff]
    %v153 = vld [vmem:[%s144 + $0x40] sm:$0xff]
    %v154 = vld [vmem:[%s144 + $0x48] sm:$0xff]
    %v155 = vld [vmem:[%s144 + $0x50] sm:$0xff]
    %v156 = vld [vmem:[%s144 + $0x58] sm:$0xff]
    %v157 = vld [vmem:[%s144 + $0x60] sm:$0xff]
    %v158 = vld [vmem:[%s144 + $0x68] sm:$0xff]
    %v159 = vld [vmem:[%s144 + $0x70] sm:$0xff]
    %v160 = vld [vmem:[%s144 + $0x78] sm:$0xff]
    %161 = vmatpush.msra.mxu0 %v160
    %162 = vmatpush.msra.mxu0 %v159
    %163 = vmatpush.msra.mxu0 %v158
    %164 = vmatpush.msra.mxu0 %v157
    %165 = vmatpush.msra.mxu0 %v156
    %166 = vmatpush.msra.mxu0 %v155
    %167 = vmatpush.msra.mxu0 %v154
    %168 = vmatpush.msra.mxu0 %v153
    %169 = vmatpush.msra.mxu0 %v152
    %170 = vmatpush.msra.mxu0 %v151
    %171 = vmatpush.msra.mxu0 %v150
    %172 = vmatpush.msra.mxu0 %v149
    %173 = vmatpush.msra.mxu0 %v148
    %174 = vmatpush.msra.mxu0 %v147
    %175 = vmatpush.msra.mxu0 %v146
    %176 = vmatpush.msra.mxu0 %v145
    %177 = vmatmul.f32.gmra.mxu0 %v63
    %v178 = vpop.f32.mrf.mxu0
    %v179 = vadd.f32 0.0, %v178
    %180 = vmatmul.f32.gmra.mxu0 %v64
    %v181 = vpop.f32.mrf.mxu0
    %v182 = vadd.f32 0.0, %v181
    %183 = vdwg.mxu0
    %v184 = vadd.f32 %v139, %v179
    %v185 = vadd.f32 %v142, %v182
    %v186 = vld [vmem:[%s3] sm:$0x1]
    %v188 = vperm.slane %v186, 0
    %v190 = vmul.f32 %v184, %v188
    %v191 = vmul.f32 %v185, %v188
    %v192 = vld [vmem:[%s4] sm:$0x1]
    %v194 = vperm.slane %v192, 0
    %v196 = vadd.f32 %v190, %v194
    %v197 = vadd.f32 %v191, %v194
    %v198 = vmax.f32 %v196, 0.0
    %v199 = vmax.f32 %v197, 0.0
    %vm202 = vcmask 1040384
    %v203 = vrot.slane %v198, 7
    %v204 = vrot.slane %v199, 7
    %v205 = vsel %vm202, %v203, %v204
    %v208 = vsel %vm202, 0.0, %v203
    %vm209 = vcmask 1046528
    %v210 = vrot.slane %v198, 1
    %v211 = vrot.slane %v199, 1
    %v212 = vsel %vm209, %v210, %v211
    %v215 = vsel %vm209, %v211, 0.0
    %v216 = vld [vmem:[#allocation5] sm:$0xff]
    %v217 = vld [vmem:[#allocation5 + $0x8] sm:$0xff]
    %v218 = vld [vmem:[#allocation5 + $0x10] sm:$0xff]
    %v219 = vld [vmem:[#allocation5 + $0x18] sm:$0xff]
    %v220 = vld [vmem:[#allocation5 + $0x20] sm:$0xff]
    %v221 = vld [vmem:[#allocation5 + $0x28] sm:$0xff]
    %v222 = vld [vmem:[#allocation5 + $0x30] sm:$0xff]
    %v223 = vld [vmem:[#allocation5 + $0x38] sm:$0xff]
    %v224 = vld [vmem:[#allocation5 + $0x40] sm:$0xff]
    %v225 = vld [vmem:[#allocation5 + $0x48] sm:$0xff]
    %v226 = vld [vmem:[#allocation5 + $0x50] sm:$0xff]
    %v227 = vld [vmem:[#allocation5 + $0x58] sm:$0xff]
    %v228 = vld [vmem:[#allocation5 + $0x60] sm:$0xff]
    %v229 = vld [vmem:[#allocation5 + $0x68] sm:$0xff]
    %v230 = vld [vmem:[#allocation5 + $0x70] sm:$0xff]
    %v231 = vld [vmem:[#allocation5 + $0x78] sm:$0xff]
    %s232 = scalar_lea.vmem [#allocation5], 128
    %v233 = vld [vmem:[%s232] sm:$0xff]
    %v234 = vld [vmem:[%s232 + $0x8] sm:$0xff]
    %v235 = vld [vmem:[%s232 + $0x10] sm:$0xff]
    %v236 = vld [vmem:[%s232 + $0x18] sm:$0xff]
    %v237 = vld [vmem:[%s232 + $0x20] sm:$0xff]
    %v238 = vld [vmem:[%s232 + $0x28] sm:$0xff]
    %v239 = vld [vmem:[%s232 + $0x30] sm:$0xff]
    %v240 = vld [vmem:[%s232 + $0x38] sm:$0xff]
    %v241 = vld [vmem:[%s232 + $0x40] sm:$0xff]
    %v242 = vld [vmem:[%s232 + $0x48] sm:$0xff]
    %v243 = vld [vmem:[%s232 + $0x50] sm:$0xff]
    %v244 = vld [vmem:[%s232 + $0x58] sm:$0xff]
    %v245 = vld [vmem:[%s232 + $0x60] sm:$0xff]
    %v246 = vld [vmem:[%s232 + $0x68] sm:$0xff]
    %v247 = vld [vmem:[%s232 + $0x70] sm:$0xff]
    %v248 = vld [vmem:[%s232 + $0x78] sm:$0xff]
    %249 = vmatpush.msra.mxu0 %v248
    %250 = vmatpush.msra.mxu0 %v247
    %251 = vmatpush.msra.mxu0 %v246
    %252 = vmatpush.msra.mxu0 %v245
    %253 = vmatpush.msra.mxu0 %v244
    %254 = vmatpush.msra.mxu0 %v243
    %255 = vmatpush.msra.mxu0 %v242
    %256 = vmatpush.msra.mxu0 %v241
    %257 = vmatpush.msra.mxu0 %v240
    %258 = vmatpush.msra.mxu0 %v239
    %259 = vmatpush.msra.mxu0 %v238
    %260 = vmatpush.msra.mxu0 %v237
    %261 = vmatpush.msra.mxu0 %v236
    %262 = vmatpush.msra.mxu0 %v235
    %263 = vmatpush.msra.mxu0 %v234
    %264 = vmatpush.msra.mxu0 %v233
    %265 = vmatmul.f32.gmra.mxu0 %v198
    %v266 = vpop.f32.mrf.mxu0
    %v267 = vadd.f32 0.0, %v266
    %268 = vmatmul.f32.gmra.mxu0 %v199
    %v269 = vpop.f32.mrf.mxu0
    %v270 = vadd.f32 0.0, %v269
    %271 = vdwg.mxu0
    %272 = vmatpush.msra.mxu0 %v231
    %273 = vmatpush.msra.mxu0 %v230
    %274 = vmatpush.msra.mxu0 %v229
    %275 = vmatpush.msra.mxu0 %v228
    %276 = vmatpush.msra.mxu0 %v227
    %277 = vmatpush.msra.mxu0 %v226
    %278 = vmatpush.msra.mxu0 %v225
    %279 = vmatpush.msra.mxu0 %v224
    %280 = vmatpush.msra.mxu0 %v223
    %281 = vmatpush.msra.mxu0 %v222
    %282 = vmatpush.msra.mxu0 %v221
    %283 = vmatpush.msra.mxu0 %v220
    %284 = vmatpush.msra.mxu0 %v219
    %285 = vmatpush.msra.mxu0 %v218
    %286 = vmatpush.msra.mxu0 %v217
    %287 = vmatpush.msra.mxu0 %v216
    %288 = vmatmul.f32.gmra.mxu0 %v208
    %v289 = vpop.f32.mrf.mxu0
    %v290 = vadd.f32 %v267, %v289
    %291 = vmatmul.f32.gmra.mxu0 %v205
    %v292 = vpop.f32.mrf.mxu0
    %v293 = vadd.f32 %v270, %v292
    %294 = vdwg.mxu0
    %s295 = scalar_lea.vmem [#allocation5], 256
    %v296 = vld [vmem:[%s295] sm:$0xff]
    %v297 = vld [vmem:[%s295 + $0x8] sm:$0xff]
    %v298 = vld [vmem:[%s295 + $0x10] sm:$0xff]
    %v299 = vld [vmem:[%s295 + $0x18] sm:$0xff]
    %v300 = vld [vmem:[%s295 + $0x20] sm:$0xff]
    %v301 = vld [vmem:[%s295 + $0x28] sm:$0xff]
    %v302 = vld [vmem:[%s295 + $0x30] sm:$0xff]
    %v303 = vld [vmem:[%s295 + $0x38] sm:$0xff]
    %v304 = vld [vmem:[%s295 + $0x40] sm:$0xff]
    %v305 = vld [vmem:[%s295 + $0x48] sm:$0xff]
    %v306 = vld [vmem:[%s295 + $0x50] sm:$0xff]
    %v307 = vld [vmem:[%s295 + $0x58] sm:$0xff]
    %v308 = vld [vmem:[%s295 + $0x60] sm:$0xff]
    %v309 = vld [vmem:[%s295 + $0x68] sm:$0xff]
    %v310 = vld [vmem:[%s295 + $0x70] sm:$0xff]
    %v311 = vld [vmem:[%s295 + $0x78] sm:$0xff]
    %312 = vmatpush.msra.mxu0 %v311
    %313 = vmatpush.msra.mxu0 %v310
    %314 = vmatpush.msra.mxu0 %v309
    %315 = vmatpush.msra.mxu0 %v308
    %316 = vmatpush.msra.mxu0 %v307
    %317 = vmatpush.msra.mxu0 %v306
    %318 = vmatpush.msra.mxu0 %v305
    %319 = vmatpush.msra.mxu0 %v304
    %320 = vmatpush.msra.mxu0 %v303
    %321 = vmatpush.msra.mxu0 %v302
    %322 = vmatpush.msra.mxu0 %v301
    %323 = vmatpush.msra.mxu0 %v300
    %324 = vmatpush.msra.mxu0 %v299
    %325 = vmatpush.msra.mxu0 %v298
    %326 = vmatpush.msra.mxu0 %v297
    %327 = vmatpush.msra.mxu0 %v296
    %328 = vmatmul.f32.gmra.mxu0 %v212
    %v329 = vpop.f32.mrf.mxu0
    %v330 = vadd.f32 0.0, %v329
    %331 = vmatmul.f32.gmra.mxu0 %v215
    %v332 = vpop.f32.mrf.mxu0
    %v333 = vadd.f32 0.0, %v332
    %334 = vdwg.mxu0
    %v335 = vadd.f32 %v290, %v330
    %v336 = vadd.f32 %v293, %v333
    %v337 = vld [vmem:[%s5] sm:$0x1]
    %v339 = vperm.slane %v337, 0
    %v341 = vmul.f32 %v335, %v339
    %v342 = vmul.f32 %v336, %v339
    %v343 = vld [vmem:[%s6] sm:$0x1]
    %v345 = vperm.slane %v343, 0
    %v347 = vadd.f32 %v341, %v345
    %v348 = vadd.f32 %v342, %v345
    %v349 = vadd.f32 %v347, %v61
    %v350 = vadd.f32 %v348, %v62
    %v351 = vmax.f32 %v349, 0.0
    %v352 = vmax.f32 %v350, 0.0
    %353 = vst [vmem:[#allocation7] sm:$0xff] %v351
    %354 = vst [vmem:[#allocation7 + $0x8] sm:$0xff] %v352
    // Predicated region
    $region38: #{tpu_custom_call.1} parent=1 // pred_check
      _
    $region39: #{tpu_custom_call.1} parent=1 // pred_check_branch
      %356 = sbr.rel (0) target = $region41
    $region40: #{tpu_custom_call.1} parent=1 // pred_region
      %358 = vsyncadd [#allocation4], 0
      %s359 = sshll.u32 [#allocation7], 4
      %s360 = int_to_ptr.vmem [resolvable:$true] %s359
      %s361 = sshll.u32 %s7, 4
      %s362 = int_to_ptr.hbm [resolvable:$true] %s361
      %367 = dma.vmem_to_hbm [thread:$0]  %s360, 256, %s362, [#allocation4], 128, 128, 8
    $region41: #{tpu_custom_call.1} parent=1 // pred_fallthru
      _
    // Predicated region
    $region42: #{tpu_custom_call.1} parent=1 // pred_check
      _
    $region43: #{tpu_custom_call.1} parent=1 // pred_check_branch
      %369 = sbr.rel (0) target = $region45
    $region44: #{tpu_custom_call.1} parent=1 // pred_region
      %371 = dma.done [#allocation4], 256
    $region45: #{tpu_custom_call.1} parent=1 // pred_fallthru
      _
    %372 = vsyncpa [#allocation3], 1
    %373 = vsyncpa [#allocation6], 1
    %374 = vsyncpa [#allocation4], 1

// kernel: tpu_custom_call.1
$region0: #{tpu_custom_call.1}
  #allocation0 [shape = 'u32[]', space=smem, size = 0x4, offset = 0x4, fixed_abs, tag = 'smem constant byte address 0x4 - core index']
  #allocation1 [shape = 'u32[72,128]{1,0:T(1,128)}', space=vmem, size = 0x9000, scoped, tag = 'internal scratch']
  %s0 = inlined_call_operand.vmem [shape: f32[1,18,128], index: 0, kind: input, shape index: {}]
  %s1 = inlined_call_operand.hbm [shape: f32[3,128,128], index: 1, kind: input, shape index: {}]
  %s2 = inlined_call_operand.hbm [shape: f32[3,128,128], index: 2, kind: input, shape index: {}]
  %s3 = inlined_call_operand.vmem [shape: f32[1,128], index: 3, kind: input, shape index: {}]
  %s4 = inlined_call_operand.vmem [shape: f32[1,128], index: 4, kind: input, shape index: {}]
  %s5 = inlined_call_operand.vmem [shape: f32[1,128], index: 5, kind: input, shape index: {}]
  %s6 = inlined_call_operand.vmem [shape: f32[1,128], index: 6, kind: input, shape index: {}]
  %s7 = inlined_call_operand.hbm [shape: f32[1,16,128], index: 7, kind: output, shape index: {}]
  %s8 = sld [smem:[#allocation0]]
  $region46: #{tpu_custom_call.1} parent=0
    _
  %s10 = ssub.s32 1, %s8
  %s11 = scalar_select 0, %s10, %s8
  $region1: #{tpu_custom_call.1} parent=0
    #allocation2 [shape = 'u8[196608]{0}', space=vmem, size = 0x30000, scoped, tag = 'input window, operand 1, single buffered']
    #allocation3 [shape = 's32[1]{0}', space=sflag, size = 0x4, scoped, tag = 'scoped memory for tpu_custom_call.1']
    #allocation4 [shape = 's32[1]{0}', space=sflag, size = 0x4, scoped, tag = 'scoped memory for tpu_custom_call.1']
    #allocation5 [shape = 'u8[196608]{0}', space=vmem, size = 0x30000, scoped, tag = 'input window, operand 2, single buffered']
    #allocation6 [shape = 's32[1]{0}', space=sflag, size = 0x4, scoped, tag = 'scoped memory for tpu_custom_call.1']
    #allocation7 [shape = 'u8[8192]{0}', space=vmem, size = 0x2000, scoped, tag = 'output window, operand 0, single buffered']
    %12 = vsyncpa [#allocation3], 0
    %13 = vsyncpa [#allocation6], 0
    %14 = vsyncpa [#allocation4], 0
    // Predicated region
    $region2: #{tpu_custom_call.1} parent=1 // pred_check
      _
    $region3: #{tpu_custom_call.1} parent=1 // pred_check_branch
      %16 = sbr.rel (0) target = $region5
    $region4: #{tpu_custom_call.1} parent=1 // pred_region
      _
    $region5: #{tpu_custom_call.1} parent=1 // pred_fallthru
      _
    // Predicated region
    $region6: #{tpu_custom_call.1} parent=1 // pred_check
      _
    $region7: #{tpu_custom_call.1} parent=1 // pred_check_branch
      %18 = sbr.rel (0) target = $region9
    $region8: #{tpu_custom_call.1} parent=1 // pred_region
      %20 = vsyncadd [#allocation3], 0
      %s21 = sshll.u32 %s1, 4
      %s22 = int_to_ptr.hbm [resolvable:$true] %s21
      %s23 = sshll.u32 [#allocation2], 4
      %s24 = int_to_ptr.vmem [resolvable:$true] %s23
      %29 = dma.hbm_to_vmem [thread:$0]  %s22, 6144, %s24, [#allocation3], 128, 128, 8
    $region9: #{tpu_custom_call.1} parent=1 // pred_fallthru
      _
    // Predicated region
    $region10: #{tpu_custom_call.1} parent=1 // pred_check
      _
    $region11: #{tpu_custom_call.1} parent=1 // pred_check_branch
      %31 = sbr.rel (0) target = $region13
    $region12: #{tpu_custom_call.1} parent=1 // pred_region
      %33 = vsyncadd [#allocation6], 0
      %s34 = sshll.u32 %s2, 4
      %s35 = int_to_ptr.hbm [resolvable:$true] %s34
      %s36 = sshll.u32 [#allocation5], 4
      %s37 = int_to_ptr.vmem [resolvable:$true] %s36
      %42 = dma.hbm_to_vmem [thread:$0]  %s35, 6144, %s37, [#allocation6], 128, 128, 8
    $region13: #{tpu_custom_call.1} parent=1 // pred_fallthru
      _
    // Predicated region
    $region14: #{tpu_custom_call.1} parent=1 // pred_check
      _
    $region15: #{tpu_custom_call.1} parent=1 // pred_check_branch
      %44 = sbr.rel (0) target = $region17
    $region16: #{tpu_custom_call.1} parent=1 // pred_region
      _
    $region17: #{tpu_custom_call.1} parent=1 // pred_fallthru
      _
    // Predicated region
    $region18: #{tpu_custom_call.1} parent=1 // pred_check
      _
    $region19: #{tpu_custom_call.1} parent=1 // pred_check_branch
      %46 = sbr.rel (0) target = $region21
    $region20: #{tpu_custom_call.1} parent=1 // pred_region
      _
    $region21: #{tpu_custom_call.1} parent=1 // pred_fallthru
      _
    // Predicated region
    $region22: #{tpu_custom_call.1} parent=1 // pred_check
      _
    $region23: #{tpu_custom_call.1} parent=1 // pred_check_branch
      %48 = sbr.rel (0) target = $region25
    $region24: #{tpu_custom_call.1} parent=1 // pred_region
      _
    $region25: #{tpu_custom_call.1} parent=1 // pred_fallthru
      _
    // Predicated region
    $region26: #{tpu_custom_call.1} parent=1 // pred_check
      _
    $region27: #{tpu_custom_call.1} parent=1 // pred_check_branch
      %50 = sbr.rel (0) target = $region29
    $region28: #{tpu_custom_call.1} parent=1 // pred_region
      _
    $region29: #{tpu_custom_call.1} parent=1 // pred_fallthru
      _
    // Predicated region
    $region30: #{tpu_custom_call.1} parent=1 // pred_check
      _
    $region31: #{tpu_custom_call.1} parent=1 // pred_check_branch
      %52 = sbr.rel (0) target = $region33
    $region32: #{tpu_custom_call.1} parent=1 // pred_region
      %54 = dma.done [#allocation3], 6144
    $region33: #{tpu_custom_call.1} parent=1 // pred_fallthru
      _
    // Predicated region
    $region34: #{tpu_custom_call.1} parent=1 // pred_check
      _
    $region35: #{tpu_custom_call.1} parent=1 // pred_check_branch
      %56 = sbr.rel (0) target = $region37
    $region36: #{tpu_custom_call.1} parent=1 // pred_region
      %58 = dma.done [#allocation6], 6144
    $region37: #{tpu_custom_call.1} parent=1 // pred_fallthru
      _
    %v59 = vld [vmem:[%s0] sm:$0xff]
    %v60 = vld [vmem:[%s0 + $0x8] sm:$0xff]
    %v61 = vld [vmem:[%s0 + $0x1] sm:$0xff]
    %v62 = vld [vmem:[%s0 + $0x9] sm:$0xff]
    %v63 = vld [vmem:[%s0 + $0x2] sm:$0xff]
    %v64 = vld [vmem:[%s0 + $0xa] sm:$0xff]
    %v65 = vld [vmem:[#allocation2] sm:$0xff]
    %v66 = vld [vmem:[#allocation2 + $0x8] sm:$0xff]
    %v67 = vld [vmem:[#allocation2 + $0x10] sm:$0xff]
    %v68 = vld [vmem:[#allocation2 + $0x18] sm:$0xff]
    %v69 = vld [vmem:[#allocation2 + $0x20] sm:$0xff]
    %v70 = vld [vmem:[#allocation2 + $0x28] sm:$0xff]
    %v71 = vld [vmem:[#allocation2 + $0x30] sm:$0xff]
    %v72 = vld [vmem:[#allocation2 + $0x38] sm:$0xff]
    %v73 = vld [vmem:[#allocation2 + $0x40] sm:$0xff]
    %v74 = vld [vmem:[#allocation2 + $0x48] sm:$0xff]
    %v75 = vld [vmem:[#allocation2 + $0x50] sm:$0xff]
    %v76 = vld [vmem:[#allocation2 + $0x58] sm:$0xff]
    %v77 = vld [vmem:[#allocation2 + $0x60] sm:$0xff]
    %v78 = vld [vmem:[#allocation2 + $0x68] sm:$0xff]
    %v79 = vld [vmem:[#allocation2 + $0x70] sm:$0xff]
    %v80 = vld [vmem:[#allocation2 + $0x78] sm:$0xff]
    %s81 = scalar_lea.vmem [#allocation2], 128
    %v82 = vld [vmem:[%s81] sm:$0xff]
    %v83 = vld [vmem:[%s81 + $0x8] sm:$0xff]
    %v84 = vld [vmem:[%s81 + $0x10] sm:$0xff]
    %v85 = vld [vmem:[%s81 + $0x18] sm:$0xff]
    %v86 = vld [vmem:[%s81 + $0x20] sm:$0xff]
    %v87 = vld [vmem:[%s81 + $0x28] sm:$0xff]
    %v88 = vld [vmem:[%s81 + $0x30] sm:$0xff]
    %v89 = vld [vmem:[%s81 + $0x38] sm:$0xff]
    %v90 = vld [vmem:[%s81 + $0x40] sm:$0xff]
    %v91 = vld [vmem:[%s81 + $0x48] sm:$0xff]
    %v92 = vld [vmem:[%s81 + $0x50] sm:$0xff]
    %v93 = vld [vmem:[%s81 + $0x58] sm:$0xff]
    %v94 = vld [vmem:[%s81 + $0x60] sm:$0xff]
    %v95 = vld [vmem:[%s81 + $0x68] sm:$0xff]
    %v96 = vld [vmem:[%s81 + $0x70] sm:$0xff]
    %v97 = vld [vmem:[%s81 + $0x78] sm:$0xff]
    %98 = vmatpush.msra.mxu0 %v97
    %99 = vmatpush.msra.mxu0 %v96
    %100 = vmatpush.msra.mxu0 %v95
    %101 = vmatpush.msra.mxu0 %v94
    %102 = vmatpush.msra.mxu0 %v93
    %103 = vmatpush.msra.mxu0 %v92
    %104 = vmatpush.msra.mxu0 %v91
    %105 = vmatpush.msra.mxu0 %v90
    %106 = vmatpush.msra.mxu0 %v89
    %107 = vmatpush.msra.mxu0 %v88
    %108 = vmatpush.msra.mxu0 %v87
    %109 = vmatpush.msra.mxu0 %v86
    %110 = vmatpush.msra.mxu0 %v85
    %111 = vmatpush.msra.mxu0 %v84
    %112 = vmatpush.msra.mxu0 %v83
    %113 = vmatpush.msra.mxu0 %v82
    %114 = vmatmul.f32.gmra.mxu0 %v61
    %v115 = vpop.f32.mrf.mxu0
    %v116 = vadd.f32 0.0, %v115
    %117 = vmatmul.f32.gmra.mxu0 %v62
    %v118 = vpop.f32.mrf.mxu0
    %v119 = vadd.f32 0.0, %v118
    %120 = vdwg.mxu0
    %121 = vmatpush.msra.mxu0 %v80
    %122 = vmatpush.msra.mxu0 %v79
    %123 = vmatpush.msra.mxu0 %v78
    %124 = vmatpush.msra.mxu0 %v77
    %125 = vmatpush.msra.mxu0 %v76
    %126 = vmatpush.msra.mxu0 %v75
    %127 = vmatpush.msra.mxu0 %v74
    %128 = vmatpush.msra.mxu0 %v73
    %129 = vmatpush.msra.mxu0 %v72
    %130 = vmatpush.msra.mxu0 %v71
    %131 = vmatpush.msra.mxu0 %v70
    %132 = vmatpush.msra.mxu0 %v69
    %133 = vmatpush.msra.mxu0 %v68
    %134 = vmatpush.msra.mxu0 %v67
    %135 = vmatpush.msra.mxu0 %v66
    %136 = vmatpush.msra.mxu0 %v65
    %137 = vmatmul.f32.gmra.mxu0 %v59
    %v138 = vpop.f32.mrf.mxu0
    %v139 = vadd.f32 %v116, %v138
    %140 = vmatmul.f32.gmra.mxu0 %v60
    %v141 = vpop.f32.mrf.mxu0
    %v142 = vadd.f32 %v119, %v141
    %143 = vdwg.mxu0
    %s144 = scalar_lea.vmem [#allocation2], 256
    %v145 = vld [vmem:[%s144] sm:$0xff]
    %v146 = vld [vmem:[%s144 + $0x8] sm:$0xff]
    %v147 = vld [vmem:[%s144 + $0x10] sm:$0xff]
    %v148 = vld [vmem:[%s144 + $0x18] sm:$0xff]
    %v149 = vld [vmem:[%s144 + $0x20] sm:$0xff]
    %v150 = vld [vmem:[%s144 + $0x28] sm:$0xff]
    %v151 = vld [vmem:[%s144 + $0x30] sm:$0xff]
    %v152 = vld [vmem:[%s144 + $0x38] sm:$0xff]
    %v153 = vld [vmem:[%s144 + $0x40] sm:$0xff]
    %v154 = vld [vmem:[%s144 + $0x48] sm:$0xff]
    %v155 = vld [vmem:[%s144 + $0x50] sm:$0xff]
    %v156 = vld [vmem:[%s144 + $0x58] sm:$0xff]
    %v157 = vld [vmem:[%s144 + $0x60] sm:$0xff]
    %v158 = vld [vmem:[%s144 + $0x68] sm:$0xff]
    %v159 = vld [vmem:[%s144 + $0x70] sm:$0xff]
    %v160 = vld [vmem:[%s144 + $0x78] sm:$0xff]
    %161 = vmatpush.msra.mxu0 %v160
    %162 = vmatpush.msra.mxu0 %v159
    %163 = vmatpush.msra.mxu0 %v158
    %164 = vmatpush.msra.mxu0 %v157
    %165 = vmatpush.msra.mxu0 %v156
    %166 = vmatpush.msra.mxu0 %v155
    %167 = vmatpush.msra.mxu0 %v154
    %168 = vmatpush.msra.mxu0 %v153
    %169 = vmatpush.msra.mxu0 %v152
    %170 = vmatpush.msra.mxu0 %v151
    %171 = vmatpush.msra.mxu0 %v150
    %172 = vmatpush.msra.mxu0 %v149
    %173 = vmatpush.msra.mxu0 %v148
    %174 = vmatpush.msra.mxu0 %v147
    %175 = vmatpush.msra.mxu0 %v146
    %176 = vmatpush.msra.mxu0 %v145
    %177 = vmatmul.f32.gmra.mxu0 %v63
    %v178 = vpop.f32.mrf.mxu0
    %v179 = vadd.f32 0.0, %v178
    %180 = vmatmul.f32.gmra.mxu0 %v64
    %v181 = vpop.f32.mrf.mxu0
    %v182 = vadd.f32 0.0, %v181
    %183 = vdwg.mxu0
    %v184 = vadd.f32 %v139, %v179
    %v185 = vadd.f32 %v142, %v182
    %v186 = vld [vmem:[%s3] sm:$0x1]
    %v188 = vperm.slane %v186, 0
    %v190 = vmul.f32 %v184, %v188
    %v191 = vmul.f32 %v185, %v188
    %v192 = vld [vmem:[%s4] sm:$0x1]
    %v194 = vperm.slane %v192, 0
    %v196 = vadd.f32 %v190, %v194
    %v197 = vadd.f32 %v191, %v194
    %v198 = vmax.f32 %v196, 0.0
    %v199 = vmax.f32 %v197, 0.0
    %vm202 = vcmask 1040384
    %v203 = vrot.slane %v198, 7
    %v204 = vrot.slane %v199, 7
    %v205 = vsel %vm202, %v203, %v204
    %v208 = vsel %vm202, 0.0, %v203
    %vm209 = vcmask 1046528
    %v210 = vrot.slane %v198, 1
    %v211 = vrot.slane %v199, 1
    %v212 = vsel %vm209, %v210, %v211
    %v215 = vsel %vm209, %v211, 0.0
    %v216 = vld [vmem:[#allocation5] sm:$0xff]
    %v217 = vld [vmem:[#allocation5 + $0x8] sm:$0xff]
    %v218 = vld [vmem:[#allocation5 + $0x10] sm:$0xff]
    %v219 = vld [vmem:[#allocation5 + $0x18] sm:$0xff]
    %v220 = vld [vmem:[#allocation5 + $0x20] sm:$0xff]
    %v221 = vld [vmem:[#allocation5 + $0x28] sm:$0xff]
    %v222 = vld [vmem:[#allocation5 + $0x30] sm:$0xff]
    %v223 = vld [vmem:[#allocation5 + $0x38] sm:$0xff]
    %v224 = vld [vmem:[#allocation5 + $0x40] sm:$0xff]
    %v225 = vld [vmem:[#allocation5 + $0x48] sm:$0xff]
    %v226 = vld [vmem:[#allocation5 + $0x50] sm:$0xff]
    %v227 = vld [vmem:[#allocation5 + $0x58] sm:$0xff]
    %v228 = vld [vmem:[#allocation5 + $0x60] sm:$0xff]
    %v229 = vld [vmem:[#allocation5 + $0x68] sm:$0xff]
    %v230 = vld [vmem:[#allocation5 + $0x70] sm:$0xff]
    %v231 = vld [vmem:[#allocation5 + $0x78] sm:$0xff]
    %s232 = scalar_lea.vmem [#allocation5], 128
    %v233 = vld [vmem:[%s232] sm:$0xff]
    %v234 = vld [vmem:[%s232 + $0x8] sm:$0xff]
    %v235 = vld [vmem:[%s232 + $0x10] sm:$0xff]
    %v236 = vld [vmem:[%s232 + $0x18] sm:$0xff]
    %v237 = vld [vmem:[%s232 + $0x20] sm:$0xff]
    %v238 = vld [vmem:[%s232 + $0x28] sm:$0xff]
    %v239 = vld [vmem:[%s232 + $0x30] sm:$0xff]
    %v240 = vld [vmem:[%s232 + $0x38] sm:$0xff]
    %v241 = vld [vmem:[%s232 + $0x40] sm:$0xff]
    %v242 = vld [vmem:[%s232 + $0x48] sm:$0xff]
    %v243 = vld [vmem:[%s232 + $0x50] sm:$0xff]
    %v244 = vld [vmem:[%s232 + $0x58] sm:$0xff]
    %v245 = vld [vmem:[%s232 + $0x60] sm:$0xff]
    %v246 = vld [vmem:[%s232 + $0x68] sm:$0xff]
    %v247 = vld [vmem:[%s232 + $0x70] sm:$0xff]
    %v248 = vld [vmem:[%s232 + $0x78] sm:$0xff]
    %249 = vmatpush.msra.mxu0 %v248
    %250 = vmatpush.msra.mxu0 %v247
    %251 = vmatpush.msra.mxu0 %v246
    %252 = vmatpush.msra.mxu0 %v245
    %253 = vmatpush.msra.mxu0 %v244
    %254 = vmatpush.msra.mxu0 %v243
    %255 = vmatpush.msra.mxu0 %v242
    %256 = vmatpush.msra.mxu0 %v241
    %257 = vmatpush.msra.mxu0 %v240
    %258 = vmatpush.msra.mxu0 %v239
    %259 = vmatpush.msra.mxu0 %v238
    %260 = vmatpush.msra.mxu0 %v237
    %261 = vmatpush.msra.mxu0 %v236
    %262 = vmatpush.msra.mxu0 %v235
    %263 = vmatpush.msra.mxu0 %v234
    %264 = vmatpush.msra.mxu0 %v233
    %265 = vmatmul.f32.gmra.mxu0 %v198
    %v266 = vpop.f32.mrf.mxu0
    %v267 = vadd.f32 0.0, %v266
    %268 = vmatmul.f32.gmra.mxu0 %v199
    %v269 = vpop.f32.mrf.mxu0
    %v270 = vadd.f32 0.0, %v269
    %271 = vdwg.mxu0
    %272 = vmatpush.msra.mxu0 %v231
    %273 = vmatpush.msra.mxu0 %v230
    %274 = vmatpush.msra.mxu0 %v229
    %275 = vmatpush.msra.mxu0 %v228
    %276 = vmatpush.msra.mxu0 %v227
    %277 = vmatpush.msra.mxu0 %v226
    %278 = vmatpush.msra.mxu0 %v225
    %279 = vmatpush.msra.mxu0 %v224
    %280 = vmatpush.msra.mxu0 %v223
    %281 = vmatpush.msra.mxu0 %v222
    %282 = vmatpush.msra.mxu0 %v221
    %283 = vmatpush.msra.mxu0 %v220
    %284 = vmatpush.msra.mxu0 %v219
    %285 = vmatpush.msra.mxu0 %v218
    %286 = vmatpush.msra.mxu0 %v217
    %287 = vmatpush.msra.mxu0 %v216
    %288 = vmatmul.f32.gmra.mxu0 %v208
    %v289 = vpop.f32.mrf.mxu0
    %v290 = vadd.f32 %v267, %v289
    %291 = vmatmul.f32.gmra.mxu0 %v205
    %v292 = vpop.f32.mrf.mxu0
    %v293 = vadd.f32 %v270, %v292
    %294 = vdwg.mxu0
    %s295 = scalar_lea.vmem [#allocation5], 256
    %v296 = vld [vmem:[%s295] sm:$0xff]
    %v297 = vld [vmem:[%s295 + $0x8] sm:$0xff]
    %v298 = vld [vmem:[%s295 + $0x10] sm:$0xff]
    %v299 = vld [vmem:[%s295 + $0x18] sm:$0xff]
    %v300 = vld [vmem:[%s295 + $0x20] sm:$0xff]
    %v301 = vld [vmem:[%s295 + $0x28] sm:$0xff]
    %v302 = vld [vmem:[%s295 + $0x30] sm:$0xff]
    %v303 = vld [vmem:[%s295 + $0x38] sm:$0xff]
    %v304 = vld [vmem:[%s295 + $0x40] sm:$0xff]
    %v305 = vld [vmem:[%s295 + $0x48] sm:$0xff]
    %v306 = vld [vmem:[%s295 + $0x50] sm:$0xff]
    %v307 = vld [vmem:[%s295 + $0x58] sm:$0xff]
    %v308 = vld [vmem:[%s295 + $0x60] sm:$0xff]
    %v309 = vld [vmem:[%s295 + $0x68] sm:$0xff]
    %v310 = vld [vmem:[%s295 + $0x70] sm:$0xff]
    %v311 = vld [vmem:[%s295 + $0x78] sm:$0xff]
    %312 = vmatpush.msra.mxu0 %v311
    %313 = vmatpush.msra.mxu0 %v310
    %314 = vmatpush.msra.mxu0 %v309
    %315 = vmatpush.msra.mxu0 %v308
    %316 = vmatpush.msra.mxu0 %v307
    %317 = vmatpush.msra.mxu0 %v306
    %318 = vmatpush.msra.mxu0 %v305
    %319 = vmatpush.msra.mxu0 %v304
    %320 = vmatpush.msra.mxu0 %v303
    %321 = vmatpush.msra.mxu0 %v302
    %322 = vmatpush.msra.mxu0 %v301
    %323 = vmatpush.msra.mxu0 %v300
    %324 = vmatpush.msra.mxu0 %v299
    %325 = vmatpush.msra.mxu0 %v298
    %326 = vmatpush.msra.mxu0 %v297
    %327 = vmatpush.msra.mxu0 %v296
    %328 = vmatmul.f32.gmra.mxu0 %v212
    %v329 = vpop.f32.mrf.mxu0
    %v330 = vadd.f32 0.0, %v329
    %331 = vmatmul.f32.gmra.mxu0 %v215
    %v332 = vpop.f32.mrf.mxu0
    %v333 = vadd.f32 0.0, %v332
    %334 = vdwg.mxu0
    %v335 = vadd.f32 %v290, %v330
    %v336 = vadd.f32 %v293, %v333
    %v337 = vld [vmem:[%s5] sm:$0x1]
    %v339 = vperm.slane %v337, 0
    %v341 = vmul.f32 %v335, %v339
    %v342 = vmul.f32 %v336, %v339
    %v343 = vld [vmem:[%s6] sm:$0x1]
    %v345 = vperm.slane %v343, 0
    %v347 = vadd.f32 %v341, %v345
    %v348 = vadd.f32 %v342, %v345
    %v349 = vadd.f32 %v347, %v61
    %v350 = vadd.f32 %v348, %v62
    %v351 = vmax.f32 %v349, 0.0
    %v352 = vmax.f32 %v350, 0.0
    %353 = vst [vmem:[#allocation7] sm:$0xff] %v351
    %354 = vst [vmem:[#allocation7 + $0x8] sm:$0xff] %v352
    // Predicated region
    $region38: #{tpu_custom_call.1} parent=1 // pred_check
      _
    $region39: #{tpu_custom_call.1} parent=1 // pred_check_branch
      %356 = sbr.rel (0) target = $region41
    $region40: #{tpu_custom_call.1} parent=1 // pred_region
      %358 = vsyncadd [#allocation4], 0
      %s359 = sshll.u32 [#allocation7], 4
      %s360 = int_to_ptr.vmem [resolvable:$true] %s359
      %s361 = sshll.u32 %s7, 4
      %s362 = int_to_ptr.hbm [resolvable:$true] %s361
      %367 = dma.vmem_to_hbm [thread:$0]  %s360, 256, %s362, [#allocation4], 128, 128, 8
    $region41: #{tpu_custom_call.1} parent=1 // pred_fallthru
      _
    // Predicated region
    $region42: #{tpu_custom_call.1} parent=1 // pred_check
      _
    $region43: #{tpu_custom_call.1} parent=1 // pred_check_branch
      %369 = sbr.rel (0) target = $region45
    $region44: #{tpu_custom_call.1} parent=1 // pred_region
      %371 = dma.done [#allocation4], 256
    $region45: #{tpu_custom_call.1} parent=1 // pred_fallthru
      _
    %372 = vsyncpa [#allocation3], 1
    %373 = vsyncpa [#allocation6], 1
    %374 = vsyncpa [#allocation4], 1

</llo_original>
